<compile_context>
chip_gen: v6e
topology: v6e:2x2x1
jax: 0.10.0
libtpu: 0.0.40
codegen_flags: <defaults>
</compile_context>

<pallas_src>
import functools

import jax
import jax.numpy as jnp
from jax import lax
from jax.experimental import pallas as pl
from jax.experimental.pallas import tpu as pltpu

_CLAMP_EPS = 1e-6            # module's self.eps
_PI = 3.141592653589793

_LANES = 128                 # batch spread along the lane axis
_ROWS_BLOCK = 512            # 512 * 128 = 65536 samples per grid step
_CHUNK_ROWS = 64             # in-kernel chunk: every f32 temporary is 8 vregs
_PALLAS_MIN_BATCH = 1 << 16  # below this the fused pure-XLA path wins


def _round_up(x, m):
    return -(-x // m) * m


# ----------------------------------------------------------------------------
# In-kernel math
# ----------------------------------------------------------------------------
def _acos(x):
    """acos(x), |x| <= 1, via A&S 4.4.46 (sqrt(1-x)*poly).  |err| <= 2e-8."""
    ax = jnp.abs(x)
    p = jnp.float32(-0.0012624911)
    p = p * ax + 0.0066700901
    p = p * ax - 0.0170881256
    p = p * ax + 0.0308918810
    p = p * ax - 0.0501743046
    p = p * ax + 0.0889789874
    p = p * ax - 0.2145988016
    p = p * ax + 1.5707963050
    r = jnp.sqrt(1.0 - ax) * p                 # acos(|x|)
    return jnp.where(x >= 0.0, r, _PI - r)


def _chunk_theta(m1_ref, m2_ref, r0, sub):
    """Geodesic angle for rows [r0, r0+sub) of the current block (f32)."""
    rows = slice(r0, r0 + sub)
    # trace(m1 @ m2^T) = sum_c m1_flat[c] * m2_flat[c]   (upcast per chunk)
    tr = (m1_ref[0, rows, :].astype(jnp.float32) *
          m2_ref[0, rows, :].astype(jnp.float32))
    for c in range(1, 9):
        tr = tr + (m1_ref[c, rows, :].astype(jnp.float32) *
                   m2_ref[c, rows, :].astype(jnp.float32))
    cos = (tr - 1.0) * 0.5
    cos = jnp.minimum(cos, 1.0 - _CLAMP_EPS)
    cos = jnp.maximum(cos, -1.0 + _CLAMP_EPS)
    return _acos(cos)


def _theta_kernel(m1_ref, m2_ref, o_ref):
    # m1_ref, m2_ref: (9, RB, 128)  component-major rotation entries
    # o_ref:          (RB, 128) f32 geodesic angle per sample
    rb = o_ref.shape[0]
    for r0 in range(0, rb, _CHUNK_ROWS):
        sub = min(_CHUNK_ROWS, rb - r0)
        o_ref[r0:r0 + sub, :] = _chunk_theta(m1_ref, m2_ref, r0, sub)


def _theta_sum_kernel(m1_ref, m2_ref, o_ref, *, batch):
    # Fused-mean path: o_ref (8, 128) = partial sum of theta over this block,
    # with padded samples (flat index >= batch) masked to zero.
    rb = m1_ref.shape[1]
    base = pl.program_id(0) * (rb * _LANES)
    # Hoisted chunk-local flat offsets (JAX does not CSE broadcast_in_dim).
    offs = (lax.broadcasted_iota(jnp.int32, (_CHUNK_ROWS, _LANES), 0) * _LANES
            + lax.broadcasted_iota(jnp.int32, (_CHUNK_ROWS, _LANES), 1))
    acc = jnp.zeros((8, _LANES), jnp.float32)
    for r0 in range(0, rb, _CHUNK_ROWS):
        sub = min(_CHUNK_ROWS, rb - r0)           # always a multiple of 8
        theta = _chunk_theta(m1_ref, m2_ref, r0, sub)
        idx = base + r0 * _LANES + offs[:sub, :]
        theta = jnp.where(idx < batch, theta, 0.0)
        for s in range(0, sub, 8):                # cheap 8-row folds, no XLU
            acc = acc + theta[s:s + 8, :]
    o_ref[...] = acc


# ----------------------------------------------------------------------------
# Wrapper: layout, grid setup, pallas_call
# ----------------------------------------------------------------------------
def _compiler_params(in_dtype, rows_block):
    itemsize = jnp.dtype(in_dtype).itemsize
    in_tile = 9 * rows_block * _LANES * itemsize          # one input block
    out_tile = rows_block * _LANES * 4                    # worst-case output
    need = 2 * (2 * in_tile) + 2 * out_tile + (2 << 20)   # double-buffered
    vmem_limit = min(max(need, 16 << 20), 48 << 20)       # safe on v5e..v7x
    return pltpu.CompilerParams(
        # Single "parallel" grid axis -> shards across the 2 TCs on v7x for
        # multi-block batches; small single-block batches use the jnp fallback.
        dimension_semantics=("parallel",),
        vmem_limit_bytes=vmem_limit,
    )


def _prep(ypred, ytrue, block_rows):
    assert ypred.shape == ytrue.shape and ypred.shape[-2:] == (3, 3)
    B = ypred.shape[0]
    dt = ypred.dtype
    if dt not in (jnp.float32, jnp.bfloat16, jnp.float16):
        dt = jnp.float32
    align = 8 if jnp.dtype(dt).itemsize == 4 else 16
    max_rows = _ROWS_BLOCK if block_rows is None else int(block_rows)
    assert max_rows > 0 and max_rows % align == 0

    rows = -(-B // _LANES)                      # ceil(B / 128)
    if rows <= max_rows:
        rows_block = _round_up(rows, align)     # single block, sublane-aligned
    else:
        rows_block = max_rows
    rows_p = _round_up(rows, rows_block)
    Bp = rows_p * _LANES

    def relayout(m):
        # Single fused pad + transpose + reshape -> lane-dense (9, rows_p, 128)
        # in the input's native (bf16/f16/f32) width.
        m = jnp.reshape(m, (B, 9)).astype(dt)
        m = jnp.pad(m.T, ((0, 0), (0, Bp - B)))
        return m.reshape(9, rows_p, _LANES)

    return relayout(ypred), relayout(ytrue), rows_p, rows_block, B, Bp


def _geodesic_theta_pallas(ypred, ytrue, block_rows=None):
    """Per-sample geodesic angle via the Pallas kernel; returns (B,) f32."""
    m1cm, m2cm, rows_p, rows_block, B, Bp = _prep(ypred, ytrue, block_rows)
    num_blocks = rows_p // rows_block
    theta = pl.pallas_call(
        _theta_kernel,
        out_shape=jax.ShapeDtypeStruct((rows_p, _LANES), jnp.float32),
        grid_spec=pl.GridSpec(
            grid=(num_blocks,),
            in_specs=[
                pl.BlockSpec((9, rows_block, _LANES), lambda i: (0, i, 0)),
                pl.BlockSpec((9, rows_block, _LANES), lambda i: (0, i, 0)),
            ],
            out_specs=pl.BlockSpec((rows_block, _LANES), lambda i: (i, 0)),
        ),
        compiler_params=_compiler_params(m1cm.dtype, rows_block),
    )(m1cm, m2cm)
    return theta.reshape(Bp)[:B]


def _geodesic_mean_pallas(ypred, ytrue, block_rows=None):
    """Mean geodesic angle, with the batch sum fused into the kernel."""
    m1cm, m2cm, rows_p, rows_block, B, Bp = _prep(ypred, ytrue, block_rows)
    num_blocks = rows_p // rows_block
    partials = pl.pallas_call(
        functools.partial(_theta_sum_kernel, batch=B),
        out_shape=jax.ShapeDtypeStruct((num_blocks * 8, _LANES), jnp.float32),
        grid_spec=pl.GridSpec(
            grid=(num_blocks,),
            in_specs=[
                pl.BlockSpec((9, rows_block, _LANES), lambda i: (0, i, 0)),
                pl.BlockSpec((9, rows_block, _LANES), lambda i: (0, i, 0)),
            ],
            out_specs=pl.BlockSpec((8, _LANES), lambda i: (i, 0)),
        ),
        compiler_params=_compiler_params(m1cm.dtype, rows_block),
    )(m1cm, m2cm)
    return jnp.sum(partials) / B


def _geodesic_theta_jnp(ypred, ytrue):
    """Fused pure-XLA fallback for small batches."""
    m1 = jnp.reshape(ypred, (-1, 9)).astype(jnp.float32)
    m2 = jnp.reshape(ytrue, (-1, 9)).astype(jnp.float32)
    cos = (jnp.sum(m1 * m2, axis=-1) - 1.0) * 0.5
    cos = jnp.clip(cos, -1.0 + _CLAMP_EPS, 1.0 - _CLAMP_EPS)
    return jnp.arccos(cos)


@functools.partial(jax.jit, static_argnames=("reduction", "use_pallas"))
def _loss_impl(ypred, ytrue, reduction, use_pallas):
    if reduction in ("mean", "batchmean"):
        if use_pallas:
            return _geodesic_mean_pallas(ypred, ytrue)
        return jnp.mean(_geodesic_theta_jnp(ypred, ytrue))
    # 'nomean' and any unknown reduction both return theta (matches PyTorch).
    if use_pallas:
        return _geodesic_theta_pallas(ypred, ytrue)
    return _geodesic_theta_jnp(ypred, ytrue)


def geodesic_loss_R(ypred, ytrue, reduction="batchmean", *, use_pallas=None):
    """Pallas implementation of geodesic_loss_R.forward (eps = 1e-6)."""
    if use_pallas is None:
        use_pallas = int(ypred.shape[0]) >= _PALLAS_MIN_BATCH
    return _loss_impl(ypred, ytrue, reduction, bool(use_pallas))


# ----------------------------------------------------------------------------
# Pure-JAX reference (bmm + trace, highest precision) and test helpers.
# ----------------------------------------------------------------------------
def _reference_theta(ypred, ytrue):
    m = jnp.einsum("bij,bkj->bik",
                   ypred.astype(jnp.float32), ytrue.astype(jnp.float32),
                   precision=lax.Precision.HIGHEST)
    cos = (m[:, 0, 0] + m[:, 1, 1] + m[:, 2, 2] - 1.0) / 2.0
    cos = jnp.clip(cos, -1.0 + _CLAMP_EPS, 1.0 - _CLAMP_EPS)
    return jnp.arccos(cos)


def _random_rotations(key, n):
    """Random valid rotation matrices via Gram-Schmidt of a (n,3,2) sample."""
    x = jax.random.normal(key, (n, 3, 2), dtype=jnp.float32)
    a, c = x[:, :, 0], x[:, :, 1]
    b1 = a / jnp.linalg.norm(a, axis=1, keepdims=True)
    u = c - jnp.sum(b1 * c, axis=1, keepdims=True) * b1
    b2 = u / jnp.linalg.norm(u, axis=1, keepdims=True)
    b3 = jnp.cross(b1, b2)
    return jnp.stack([b1, b2, b3], axis=-1)


if __name__ == "__main__":
    key = jax.random.PRNGKey(0)
    k1, k2 = jax.random.split(key)

    # 1) Pallas path (single block), small batch of 3x3 rotations.
    B = 2048
    ypred = _random_rotations(k1, B)
    ytrue = _random_rotations(k2, B)

    theta = geodesic_loss_R(ypred, ytrue, reduction="nomean", use_pallas=True)
    loss = geodesic_loss_R(ypred, ytrue, reduction="batchmean", use_pallas=True)
    mean = geodesic_loss_R(ypred, ytrue, reduction="mean", use_pallas=True)
    theta, loss, mean = jax.block_until_ready((theta, loss, mean))

    ref_theta = _reference_theta(ypred, ytrue)
    assert theta.shape == (B,), theta.shape
    # cos-space check is well conditioned everywhere; theta uses a looser
    # tolerance because acos amplifies f32 summation-order noise near cos=+-1.
    assert jnp.allclose(jnp.cos(theta), jnp.cos(ref_theta), atol=1e-5, rtol=1e-5)
    assert jnp.allclose(theta, ref_theta, atol=2e-3, rtol=2e-3)
    assert jnp.allclose(loss, jnp.mean(ref_theta), atol=1e-4, rtol=1e-4)
    assert jnp.allclose(mean, jnp.mean(ref_theta), atol=1e-4, rtol=1e-4)

    # 2) Multi-block grid + padded tail, exercised at small size with a small
    #    block_rows override (covers the masking / multi-block code paths).
    B2 = 1500
    k3, k4 = jax.random.split(k2)
    yp2 = _random_rotations(k3, B2)
    yt2 = _random_rotations(k4, B2)
    theta2 = jax.jit(lambda a, b: _geodesic_theta_pallas(a, b, block_rows=8))(yp2, yt2)
    loss2 = jax.jit(lambda a, b: _geodesic_mean_pallas(a, b, block_rows=8))(yp2, yt2)
    theta2, loss2 = jax.block_until_ready((theta2, loss2))
    ref2 = _reference_theta(yp2, yt2)
    assert theta2.shape == (B2,), theta2.shape
    assert jnp.allclose(jnp.cos(theta2), jnp.cos(ref2), atol=1e-5, rtol=1e-5)
    assert jnp.allclose(theta2, ref2, atol=2e-3, rtol=2e-3)
    assert jnp.allclose(loss2, jnp.mean(ref2), atol=1e-4, rtol=1e-4)

    # 3) Small-batch fused-XLA fallback (default dispatch, B < 64K).
    loss_small = jax.block_until_ready(geodesic_loss_R(ypred, ytrue))
    assert jnp.allclose(loss_small, jnp.mean(ref_theta), atol=1e-4, rtol=1e-4)

    print("KERNEL_OK")
</pallas_src>

<mosaic_0001>
module attributes {stable_mosaic.version = 11 : i64} {
  func.func @_theta_kernel(%arg0: i32, %arg1: memref<9x16x128xf32, #tpu.memory_space<vmem>>, %arg2: memref<9x16x128xf32, #tpu.memory_space<vmem>>, %arg3: memref<16x128xf32, #tpu.memory_space<vmem>>) attributes {dimension_semantics = [#tpu.dimension_semantics<parallel>], iteration_bounds = array<i64: 1>, scalar_prefetch = 0 : i64, scratch_operands = 0 : i64, tpu.core_type = #tpu.core_type<tc>, window_params = [{transform_indices = @transform_0, window_bounds = array<i64: 9, 16, 128>}, {transform_indices = @transform_1, window_bounds = array<i64: 9, 16, 128>}, {transform_indices = @transform_2, window_bounds = array<i64: 16, 128>}]} {
    %c0 = arith.constant 0 : index
    %c0_0 = arith.constant 0 : index
    %c0_1 = arith.constant 0 : index
    %0 = vector.load %arg1[%c0, %c0_0, %c0_1] : memref<9x16x128xf32, #tpu.memory_space<vmem>>, vector<1x16x128xf32>
    %1 = vector.shape_cast %0 : vector<1x16x128xf32> to vector<16x128xf32>
    %c0_2 = arith.constant 0 : index
    %c0_3 = arith.constant 0 : index
    %c0_4 = arith.constant 0 : index
    %2 = vector.load %arg2[%c0_2, %c0_3, %c0_4] : memref<9x16x128xf32, #tpu.memory_space<vmem>>, vector<1x16x128xf32>
    %3 = vector.shape_cast %2 : vector<1x16x128xf32> to vector<16x128xf32>
    %4 = arith.mulf %1, %3 : vector<16x128xf32>
    %c1 = arith.constant 1 : index
    %c0_5 = arith.constant 0 : index
    %c0_6 = arith.constant 0 : index
    %5 = vector.load %arg1[%c1, %c0_5, %c0_6] : memref<9x16x128xf32, #tpu.memory_space<vmem>>, vector<1x16x128xf32>
    %6 = vector.shape_cast %5 : vector<1x16x128xf32> to vector<16x128xf32>
    %c1_7 = arith.constant 1 : index
    %c0_8 = arith.constant 0 : index
    %c0_9 = arith.constant 0 : index
    %7 = vector.load %arg2[%c1_7, %c0_8, %c0_9] : memref<9x16x128xf32, #tpu.memory_space<vmem>>, vector<1x16x128xf32>
    %8 = vector.shape_cast %7 : vector<1x16x128xf32> to vector<16x128xf32>
    %9 = arith.mulf %6, %8 : vector<16x128xf32>
    %10 = arith.addf %4, %9 : vector<16x128xf32>
    %c2 = arith.constant 2 : index
    %c0_10 = arith.constant 0 : index
    %c0_11 = arith.constant 0 : index
    %11 = vector.load %arg1[%c2, %c0_10, %c0_11] : memref<9x16x128xf32, #tpu.memory_space<vmem>>, vector<1x16x128xf32>
    %12 = vector.shape_cast %11 : vector<1x16x128xf32> to vector<16x128xf32>
    %c2_12 = arith.constant 2 : index
    %c0_13 = arith.constant 0 : index
    %c0_14 = arith.constant 0 : index
    %13 = vector.load %arg2[%c2_12, %c0_13, %c0_14] : memref<9x16x128xf32, #tpu.memory_space<vmem>>, vector<1x16x128xf32>
    %14 = vector.shape_cast %13 : vector<1x16x128xf32> to vector<16x128xf32>
    %15 = arith.mulf %12, %14 : vector<16x128xf32>
    %16 = arith.addf %10, %15 : vector<16x128xf32>
    %c3 = arith.constant 3 : index
    %c0_15 = arith.constant 0 : index
    %c0_16 = arith.constant 0 : index
    %17 = vector.load %arg1[%c3, %c0_15, %c0_16] : memref<9x16x128xf32, #tpu.memory_space<vmem>>, vector<1x16x128xf32>
    %18 = vector.shape_cast %17 : vector<1x16x128xf32> to vector<16x128xf32>
    %c3_17 = arith.constant 3 : index
    %c0_18 = arith.constant 0 : index
    %c0_19 = arith.constant 0 : index
    %19 = vector.load %arg2[%c3_17, %c0_18, %c0_19] : memref<9x16x128xf32, #tpu.memory_space<vmem>>, vector<1x16x128xf32>
    %20 = vector.shape_cast %19 : vector<1x16x128xf32> to vector<16x128xf32>
    %21 = arith.mulf %18, %20 : vector<16x128xf32>
    %22 = arith.addf %16, %21 : vector<16x128xf32>
    %c4 = arith.constant 4 : index
    %c0_20 = arith.constant 0 : index
    %c0_21 = arith.constant 0 : index
    %23 = vector.load %arg1[%c4, %c0_20, %c0_21] : memref<9x16x128xf32, #tpu.memory_space<vmem>>, vector<1x16x128xf32>
    %24 = vector.shape_cast %23 : vector<1x16x128xf32> to vector<16x128xf32>
    %c4_22 = arith.constant 4 : index
    %c0_23 = arith.constant 0 : index
    %c0_24 = arith.constant 0 : index
    %25 = vector.load %arg2[%c4_22, %c0_23, %c0_24] : memref<9x16x128xf32, #tpu.memory_space<vmem>>, vector<1x16x128xf32>
    %26 = vector.shape_cast %25 : vector<1x16x128xf32> to vector<16x128xf32>
    %27 = arith.mulf %24, %26 : vector<16x128xf32>
    %28 = arith.addf %22, %27 : vector<16x128xf32>
    %c5 = arith.constant 5 : index
    %c0_25 = arith.constant 0 : index
    %c0_26 = arith.constant 0 : index
    %29 = vector.load %arg1[%c5, %c0_25, %c0_26] : memref<9x16x128xf32, #tpu.memory_space<vmem>>, vector<1x16x128xf32>
    %30 = vector.shape_cast %29 : vector<1x16x128xf32> to vector<16x128xf32>
    %c5_27 = arith.constant 5 : index
    %c0_28 = arith.constant 0 : index
    %c0_29 = arith.constant 0 : index
    %31 = vector.load %arg2[%c5_27, %c0_28, %c0_29] : memref<9x16x128xf32, #tpu.memory_space<vmem>>, vector<1x16x128xf32>
    %32 = vector.shape_cast %31 : vector<1x16x128xf32> to vector<16x128xf32>
    %33 = arith.mulf %30, %32 : vector<16x128xf32>
    %34 = arith.addf %28, %33 : vector<16x128xf32>
    %c6 = arith.constant 6 : index
    %c0_30 = arith.constant 0 : index
    %c0_31 = arith.constant 0 : index
    %35 = vector.load %arg1[%c6, %c0_30, %c0_31] : memref<9x16x128xf32, #tpu.memory_space<vmem>>, vector<1x16x128xf32>
    %36 = vector.shape_cast %35 : vector<1x16x128xf32> to vector<16x128xf32>
    %c6_32 = arith.constant 6 : index
    %c0_33 = arith.constant 0 : index
    %c0_34 = arith.constant 0 : index
    %37 = vector.load %arg2[%c6_32, %c0_33, %c0_34] : memref<9x16x128xf32, #tpu.memory_space<vmem>>, vector<1x16x128xf32>
    %38 = vector.shape_cast %37 : vector<1x16x128xf32> to vector<16x128xf32>
    %39 = arith.mulf %36, %38 : vector<16x128xf32>
    %40 = arith.addf %34, %39 : vector<16x128xf32>
    %c7 = arith.constant 7 : index
    %c0_35 = arith.constant 0 : index
    %c0_36 = arith.constant 0 : index
    %41 = vector.load %arg1[%c7, %c0_35, %c0_36] : memref<9x16x128xf32, #tpu.memory_space<vmem>>, vector<1x16x128xf32>
    %42 = vector.shape_cast %41 : vector<1x16x128xf32> to vector<16x128xf32>
    %c7_37 = arith.constant 7 : index
    %c0_38 = arith.constant 0 : index
    %c0_39 = arith.constant 0 : index
    %43 = vector.load %arg2[%c7_37, %c0_38, %c0_39] : memref<9x16x128xf32, #tpu.memory_space<vmem>>, vector<1x16x128xf32>
    %44 = vector.shape_cast %43 : vector<1x16x128xf32> to vector<16x128xf32>
    %45 = arith.mulf %42, %44 : vector<16x128xf32>
    %46 = arith.addf %40, %45 : vector<16x128xf32>
    %c8 = arith.constant 8 : index
    %c0_40 = arith.constant 0 : index
    %c0_41 = arith.constant 0 : index
    %47 = vector.load %arg1[%c8, %c0_40, %c0_41] : memref<9x16x128xf32, #tpu.memory_space<vmem>>, vector<1x16x128xf32>
    %48 = vector.shape_cast %47 : vector<1x16x128xf32> to vector<16x128xf32>
    %c8_42 = arith.constant 8 : index
    %c0_43 = arith.constant 0 : index
    %c0_44 = arith.constant 0 : index
    %49 = vector.load %arg2[%c8_42, %c0_43, %c0_44] : memref<9x16x128xf32, #tpu.memory_space<vmem>>, vector<1x16x128xf32>
    %50 = vector.shape_cast %49 : vector<1x16x128xf32> to vector<16x128xf32>
    %51 = arith.mulf %48, %50 : vector<16x128xf32>
    %52 = arith.addf %46, %51 : vector<16x128xf32>
    %cst = arith.constant 1.000000e+00 : f32
    %53 = vector.broadcast %cst : f32 to vector<16x128xf32>
    %54 = arith.subf %52, %53 : vector<16x128xf32>
    %cst_45 = arith.constant 5.000000e-01 : f32
    %55 = vector.broadcast %cst_45 : f32 to vector<16x128xf32>
    %56 = arith.mulf %54, %55 : vector<16x128xf32>
    %cst_46 = arith.constant 0.999998986 : f32
    %57 = vector.broadcast %cst_46 : f32 to vector<16x128xf32>
    %58 = arith.minimumf %56, %57 : vector<16x128xf32>
    %cst_47 = arith.constant -0.999998986 : f32
    %59 = vector.broadcast %cst_47 : f32 to vector<16x128xf32>
    %60 = arith.maximumf %58, %59 : vector<16x128xf32>
    %61 = math.absf %60 : vector<16x128xf32>
    %cst_48 = arith.constant -0.0012624911 : f32
    %62 = vector.broadcast %cst_48 : f32 to vector<16x128xf32>
    %63 = arith.mulf %62, %61 : vector<16x128xf32>
    %cst_49 = arith.constant 6.670090e-03 : f32
    %64 = vector.broadcast %cst_49 : f32 to vector<16x128xf32>
    %65 = arith.addf %63, %64 : vector<16x128xf32>
    %66 = arith.mulf %65, %61 : vector<16x128xf32>
    %cst_50 = arith.constant 0.0170881264 : f32
    %67 = vector.broadcast %cst_50 : f32 to vector<16x128xf32>
    %68 = arith.subf %66, %67 : vector<16x128xf32>
    %69 = arith.mulf %68, %61 : vector<16x128xf32>
    %cst_51 = arith.constant 0.0308918804 : f32
    %70 = vector.broadcast %cst_51 : f32 to vector<16x128xf32>
    %71 = arith.addf %69, %70 : vector<16x128xf32>
    %72 = arith.mulf %71, %61 : vector<16x128xf32>
    %cst_52 = arith.constant 0.0501743034 : f32
    %73 = vector.broadcast %cst_52 : f32 to vector<16x128xf32>
    %74 = arith.subf %72, %73 : vector<16x128xf32>
    %75 = arith.mulf %74, %61 : vector<16x128xf32>
    %cst_53 = arith.constant 0.0889789909 : f32
    %76 = vector.broadcast %cst_53 : f32 to vector<16x128xf32>
    %77 = arith.addf %75, %76 : vector<16x128xf32>
    %78 = arith.mulf %77, %61 : vector<16x128xf32>
    %cst_54 = arith.constant 0.214598805 : f32
    %79 = vector.broadcast %cst_54 : f32 to vector<16x128xf32>
    %80 = arith.subf %78, %79 : vector<16x128xf32>
    %81 = arith.mulf %80, %61 : vector<16x128xf32>
    %cst_55 = arith.constant 1.57079625 : f32
    %82 = vector.broadcast %cst_55 : f32 to vector<16x128xf32>
    %83 = arith.addf %81, %82 : vector<16x128xf32>
    %cst_56 = arith.constant 1.000000e+00 : f32
    %84 = vector.broadcast %cst_56 : f32 to vector<16x128xf32>
    %85 = arith.subf %84, %61 : vector<16x128xf32>
    %86 = math.sqrt %85 : vector<16x128xf32>
    %87 = arith.mulf %86, %83 : vector<16x128xf32>
    %cst_57 = arith.constant 0.000000e+00 : f32
    %88 = vector.broadcast %cst_57 : f32 to vector<16x128xf32>
    %89 = arith.cmpf oge, %60, %88 : vector<16x128xf32>
    %cst_58 = arith.constant 3.14159274 : f32
    %90 = vector.broadcast %cst_58 : f32 to vector<16x128xf32>
    %91 = arith.subf %90, %87 : vector<16x128xf32>
    %92 = arith.select %89, %87, %91 : vector<16x128xi1>, vector<16x128xf32>
    %c0_59 = arith.constant 0 : index
    %c0_60 = arith.constant 0 : index
    %93 = vector.load %arg3[%c0_59, %c0_60] : memref<16x128xf32, #tpu.memory_space<vmem>>, vector<16x128xf32>
    tpu.vector_store %arg3[%c0_59, %c0_60], %92 {strides = array<i32>} : memref<16x128xf32, #tpu.memory_space<vmem>>, vector<16x128xf32>,
    return
  }
  func.func @transform_0(%arg0: i32) -> (i32, i32, i32) {
    %c0_i32 = arith.constant 0 : i32
    %c0_i32_0 = arith.constant 0 : i32
    %c0_i32_1 = arith.constant 0 : i32
    return %c0_i32, %arg0, %c0_i32_0 : i32, i32, i32
  }
  func.func @transform_1(%arg0: i32) -> (i32, i32, i32) {
    %c0_i32 = arith.constant 0 : i32
    %c0_i32_0 = arith.constant 0 : i32
    %c0_i32_1 = arith.constant 0 : i32
    return %c0_i32, %arg0, %c0_i32_0 : i32, i32, i32
  }
  func.func @transform_2(%arg0: i32) -> (i32, i32) {
    %c0_i32 = arith.constant 0 : i32
    %c0_i32_0 = arith.constant 0 : i32
    return %arg0, %c0_i32 : i32, i32
  }
}

</mosaic_0001>

<llo_original>
// kernel: _loss_impl.1
$region0: #{_loss_impl.1}
  #allocation0 [shape = 'u32[]', space=smem, size = 0x4, offset = 0x4, fixed_abs, tag = 'smem constant byte address 0x4 - core index']
  #allocation1 [shape = 'u32[144,128]{1,0:T(1,128)}', space=vmem, size = 0x12000, scoped, tag = 'internal scratch']
  %s0 = inlined_call_operand.vmem [shape: f32[9,16,128], index: 0, kind: input, shape index: {}]
  %s1 = inlined_call_operand.vmem [shape: f32[9,16,128], index: 1, kind: input, shape index: {}]
  %s2 = inlined_call_operand.hbm [shape: f32[16,128], index: 2, kind: output, shape index: {}]
  %s3 = sld [smem:[#allocation0]]
  $region18: #{_loss_impl.1} parent=0
    _
  %s5 = ssub.s32 1, %s3
  %s6 = scalar_select 0, %s5, %s3
  $region1: #{_loss_impl.1} parent=0
    #allocation2 [shape = 'u8[8192]{0}', space=vmem, size = 0x2000, scoped, tag = 'output window, operand 0, single buffered']
    #allocation3 [shape = 's32[1]{0}', space=sflag, size = 0x4, scoped, tag = 'scoped memory for _loss_impl.1']
    %7 = vsyncpa [#allocation3], 0
    // Predicated region
    $region2: #{_loss_impl.1} parent=1 // pred_check
      _
    $region3: #{_loss_impl.1} parent=1 // pred_check_branch
      %9 = sbr.rel (0) target = $region5
    $region4: #{_loss_impl.1} parent=1 // pred_region
      _
    $region5: #{_loss_impl.1} parent=1 // pred_fallthru
      _
    // Predicated region
    $region6: #{_loss_impl.1} parent=1 // pred_check
      _
    $region7: #{_loss_impl.1} parent=1 // pred_check_branch
      %11 = sbr.rel (0) target = $region9
    $region8: #{_loss_impl.1} parent=1 // pred_region
      _
    $region9: #{_loss_impl.1} parent=1 // pred_fallthru
      _
    %v12 = vld [vmem:[%s0] sm:$0xff]
    %v13 = vld [vmem:[%s0 + $0x8] sm:$0xff]
    %v14 = vld [vmem:[%s1] sm:$0xff]
    %v15 = vld [vmem:[%s1 + $0x8] sm:$0xff]
    %v16 = vmul.f32 %v12, %v14
    %v17 = vmul.f32 %v13, %v15
    %s18 = scalar_lea.vmem %s0, 16
    %v19 = vld [vmem:[%s18] sm:$0xff]
    %v20 = vld [vmem:[%s18 + $0x8] sm:$0xff]
    %s21 = scalar_lea.vmem %s1, 16
    %v22 = vld [vmem:[%s21] sm:$0xff]
    %v23 = vld [vmem:[%s21 + $0x8] sm:$0xff]
    %v24 = vmul.f32 %v19, %v22
    %v25 = vmul.f32 %v20, %v23
    %v26 = vadd.f32 %v16, %v24
    %v27 = vadd.f32 %v17, %v25
    %s28 = scalar_lea.vmem %s0, 32
    %v29 = vld [vmem:[%s28] sm:$0xff]
    %v30 = vld [vmem:[%s28 + $0x8] sm:$0xff]
    %s31 = scalar_lea.vmem %s1, 32
    %v32 = vld [vmem:[%s31] sm:$0xff]
    %v33 = vld [vmem:[%s31 + $0x8] sm:$0xff]
    %v34 = vmul.f32 %v29, %v32
    %v35 = vmul.f32 %v30, %v33
    %v36 = vadd.f32 %v26, %v34
    %v37 = vadd.f32 %v27, %v35
    %s38 = scalar_lea.vmem %s0, 48
    %v39 = vld [vmem:[%s38] sm:$0xff]
    %v40 = vld [vmem:[%s38 + $0x8] sm:$0xff]
    %s41 = scalar_lea.vmem %s1, 48
    %v42 = vld [vmem:[%s41] sm:$0xff]
    %v43 = vld [vmem:[%s41 + $0x8] sm:$0xff]
    %v44 = vmul.f32 %v39, %v42
    %v45 = vmul.f32 %v40, %v43
    %v46 = vadd.f32 %v36, %v44
    %v47 = vadd.f32 %v37, %v45
    %s48 = scalar_lea.vmem %s0, 64
    %v49 = vld [vmem:[%s48] sm:$0xff]
    %v50 = vld [vmem:[%s48 + $0x8] sm:$0xff]
    %s51 = scalar_lea.vmem %s1, 64
    %v52 = vld [vmem:[%s51] sm:$0xff]
    %v53 = vld [vmem:[%s51 + $0x8] sm:$0xff]
    %v54 = vmul.f32 %v49, %v52
    %v55 = vmul.f32 %v50, %v53
    %v56 = vadd.f32 %v46, %v54
    %v57 = vadd.f32 %v47, %v55
    %s58 = scalar_lea.vmem %s0, 80
    %v59 = vld [vmem:[%s58] sm:$0xff]
    %v60 = vld [vmem:[%s58 + $0x8] sm:$0xff]
    %s61 = scalar_lea.vmem %s1, 80
    %v62 = vld [vmem:[%s61] sm:$0xff]
    %v63 = vld [vmem:[%s61 + $0x8] sm:$0xff]
    %v64 = vmul.f32 %v59, %v62
    %v65 = vmul.f32 %v60, %v63
    %v66 = vadd.f32 %v56, %v64
    %v67 = vadd.f32 %v57, %v65
    %s68 = scalar_lea.vmem %s0, 96
    %v69 = vld [vmem:[%s68] sm:$0xff]
    %v70 = vld [vmem:[%s68 + $0x8] sm:$0xff]
    %s71 = scalar_lea.vmem %s1, 96
    %v72 = vld [vmem:[%s71] sm:$0xff]
    %v73 = vld [vmem:[%s71 + $0x8] sm:$0xff]
    %v74 = vmul.f32 %v69, %v72
    %v75 = vmul.f32 %v70, %v73
    %v76 = vadd.f32 %v66, %v74
    %v77 = vadd.f32 %v67, %v75
    %s78 = scalar_lea.vmem %s0, 112
    %v79 = vld [vmem:[%s78] sm:$0xff]
    %v80 = vld [vmem:[%s78 + $0x8] sm:$0xff]
    %s81 = scalar_lea.vmem %s1, 112
    %v82 = vld [vmem:[%s81] sm:$0xff]
    %v83 = vld [vmem:[%s81 + $0x8] sm:$0xff]
    %v84 = vmul.f32 %v79, %v82
    %v85 = vmul.f32 %v80, %v83
    %v86 = vadd.f32 %v76, %v84
    %v87 = vadd.f32 %v77, %v85
    %s88 = scalar_lea.vmem %s0, 128
    %v89 = vld [vmem:[%s88] sm:$0xff]
    %v90 = vld [vmem:[%s88 + $0x8] sm:$0xff]
    %s91 = scalar_lea.vmem %s1, 128
    %v92 = vld [vmem:[%s91] sm:$0xff]
    %v93 = vld [vmem:[%s91 + $0x8] sm:$0xff]
    %v94 = vmul.f32 %v89, %v92
    %v95 = vmul.f32 %v90, %v93
    %v96 = vadd.f32 %v86, %v94
    %v97 = vadd.f32 %v87, %v95
    %v98 = vsub.f32 %v96, 1.0
    %v99 = vsub.f32 %v97, 1.0
    %v100 = vmul.f32 %v98, 0.5
    %v101 = vmul.f32 %v99, 0.5
    %v102 = vmin.f32 %v100, 0.999999
    %v103 = vmin.f32 %v101, 0.999999
    %v104 = vmax.f32 %v102, -0.999999
    %v105 = vmax.f32 %v103, -0.999999
    %v106 = vand.u32 2147483647, %v104
    %v107 = vand.u32 2147483647, %v105
    %v108 = vmul.f32 %v106, -0.0012624911
    %v109 = vmul.f32 %v107, -0.0012624911
    %v110 = vadd.f32 %v108, 0.00667009
    %v111 = vadd.f32 %v109, 0.00667009
    %v112 = vmul.f32 %v110, %v106
    %v113 = vmul.f32 %v111, %v107
    %v114 = vsub.f32 %v112, 0.017088126
    %v115 = vsub.f32 %v113, 0.017088126
    %v116 = vmul.f32 %v114, %v106
    %v117 = vmul.f32 %v115, %v107
    %v118 = vadd.f32 %v116, 0.03089188
    %v119 = vadd.f32 %v117, 0.03089188
    %v120 = vmul.f32 %v118, %v106
    %v121 = vmul.f32 %v119, %v107
    %v122 = vsub.f32 %v120, 0.050174303
    %v123 = vsub.f32 %v121, 0.050174303
    %v124 = vmul.f32 %v122, %v106
    %v125 = vmul.f32 %v123, %v107
    %v126 = vadd.f32 %v124, 0.08897899
    %v127 = vadd.f32 %v125, 0.08897899
    %v128 = vmul.f32 %v126, %v106
    %v129 = vmul.f32 %v127, %v107
    %v130 = vsub.f32 %v128, 0.2145988
    %v131 = vsub.f32 %v129, 0.2145988
    %v132 = vmul.f32 %v130, %v106
    %v133 = vmul.f32 %v131, %v107
    %v134 = vadd.f32 %v132, 1.5707963
    %v135 = vadd.f32 %v133, 1.5707963
    %v136 = vsub.f32 1.0, %v106
    %v137 = vsub.f32 1.0, %v107
    %v138 = vrsqrt.pop %v136
    %v139 = vmul.f32 %v136, %v138
    %vm140 = vcmp.eq.f32.partialorder %v136, inf
    %v141 = vsel %vm140, %v136, %v139
    %vm142 = vcmp.eq.f32.partialorder %v136, 0.0
    %v143 = vand.u32 %v136, 2147483648
    %v144 = vsel %vm142, %v143, %v141
    %v145 = vrsqrt.pop %v137
    %v146 = vmul.f32 %v137, %v145
    %vm147 = vcmp.eq.f32.partialorder %v137, inf
    %v148 = vsel %vm147, %v137, %v146
    %vm149 = vcmp.eq.f32.partialorder %v137, 0.0
    %v150 = vand.u32 %v137, 2147483648
    %v151 = vsel %vm149, %v150, %v148
    %v152 = vmul.f32 %v144, %v134
    %v153 = vmul.f32 %v151, %v135
    %vm154 = vcmp.ge.f32.partialorder %v104, 0.0
    %vm155 = vcmp.ge.f32.partialorder %v105, 0.0
    %v156 = vsub.f32 3.1415927, %v152
    %v157 = vsub.f32 3.1415927, %v153
    %v158 = vsel %vm154, %v152, %v156
    %v159 = vsel %vm155, %v153, %v157
    %160 = vst [vmem:[#allocation2] sm:$0xff] %v158
    %161 = vst [vmem:[#allocation2 + $0x8] sm:$0xff] %v159
    // Predicated region
    $region10: #{_loss_impl.1} parent=1 // pred_check
      _
    $region11: #{_loss_impl.1} parent=1 // pred_check_branch
      %163 = sbr.rel (0) target = $region13
    $region12: #{_loss_impl.1} parent=1 // pred_region
      %s165 = ssub.s32 256, 256
      %166 = vsyncadd [#allocation3], %s165
      %s167 = sshll.u32 [#allocation2], 4
      %s168 = int_to_ptr.vmem [resolvable:$true] %s167
      %173 = dma.vmem_to_hbm [thread:$0]  %s168, 256, %s2, [#allocation3], 128, 128, 8
    $region13: #{_loss_impl.1} parent=1 // pred_fallthru
      _
    // Predicated region
    $region14: #{_loss_impl.1} parent=1 // pred_check
      _
    $region15: #{_loss_impl.1} parent=1 // pred_check_branch
      %175 = sbr.rel (0) target = $region17
    $region16: #{_loss_impl.1} parent=1 // pred_region
      %176 = dma.done [#allocation3], 256
    $region17: #{_loss_impl.1} parent=1 // pred_fallthru
      _
    %177 = vsyncpa [#allocation3], 1

</llo_original>
